<compile_context>
chip_gen: v7x
topology: tpu7x:2x2x1
jax: 0.10.0
libtpu: 0.0.40
codegen_flags: <defaults>
</compile_context>

<pallas_src>
import functools

import jax
import jax.numpy as jnp
from jax.experimental import pallas as pl
from jax.experimental.pallas import tpu as pltpu

Z_DIM = 5
HIDDEN = 15
OUTPUT_DIM = 2
BN_EPS = 1e-5
LEAKY_SLOPE = 0.2

# Fits every chip's scoped VMEM budget (v5e default is only 16 MiB; v7x physical is 64 MiB).
VMEM_LIMIT_BYTES = 32 * 1024 * 1024
DEFAULT_TILE_B = 65536


def _hidden_act(x_tile, w1b1_ref):
    """LeakyReLU(W1 @ x + b1) for one (Z_DIM, TILE_B) tile -> (HIDDEN, TILE_B) f32."""
    w1 = w1b1_ref[:, :Z_DIM]          # (HIDDEN, Z_DIM)
    b1 = w1b1_ref[:, Z_DIM:]          # (HIDDEN, 1)
    h = jnp.dot(w1, x_tile, preferred_element_type=jnp.float32) + b1
    return jnp.maximum(h, LEAKY_SLOPE * h)   # mul+max, cheaper than compare+select


def _stats_kernel(x_ref, w1b1_ref, stats_ref):
    """Pass 1: accumulate per-feature [sum, sum_of_squares] for this core's batch tiles.

    stats_ref is a resident (HIDDEN, 2) accumulator (one per leading 'core' grid index).
    Padding columns are NOT masked here; their constant contribution is removed in the
    wrapper (cheaper than iota+compare+select on every element of every tile).
    """
    @pl.when(pl.program_id(1) == 0)
    def _():
        stats_ref[...] = jnp.zeros_like(stats_ref)

    h = _hidden_act(x_ref[...], w1b1_ref)                            # (HIDDEN, TILE_B)
    stats_ref[:, 0:1] += jnp.sum(h, axis=1, keepdims=True)           # column writes: no
    stats_ref[:, 1:2] += jnp.sum(h * h, axis=1, keepdims=True)       # per-step concatenate


def _apply_kernel(x_ref, w1b1_ref, w2b2_ref, o_ref):
    """Pass 2: Linear1 + LeakyReLU + (BN folded into) Linear2 + tanh for one batch tile."""
    h = _hidden_act(x_ref[...], w1b1_ref)                            # (HIDDEN, TILE_B)
    w2 = w2b2_ref[:, :HIDDEN]                                        # (OUTPUT_DIM, HIDDEN)
    b2 = w2b2_ref[:, HIDDEN:]                                        # (OUTPUT_DIM, 1)
    out = jnp.dot(w2, h, preferred_element_type=jnp.float32) + b2
    o_ref[...] = jnp.tanh(out).astype(o_ref.dtype)


def _forward_lanes(xt, params, *, tile_b):
    """Core forward on lane-dense input xt: (Z_DIM, B) f32 -> (OUTPUT_DIM, B) f32."""
    w1, b1, gamma, beta, w2, b2 = params
    B = xt.shape[1]

    tile_b = max(128, (tile_b // 128) * 128)
    tb = min(tile_b, pl.cdiv(B, 128) * 128)          # lane-aligned batch tile
    # Pad to a multiple of 2*tb so pass 1 can split its tiles across 2 TensorCores (v7x).
    b_pad = pl.cdiv(B, 2 * tb) * (2 * tb)
    nt = b_pad // tb                                  # even by construction
    nt_half = nt // 2

    xt = xt.astype(jnp.float32)
    if b_pad != B:
        xt = jnp.pad(xt, ((0, 0), (0, b_pad - B)))                               # (Z_DIM, b_pad)
    w1b1 = jnp.concatenate([w1, b1[:, None]], axis=1).astype(jnp.float32)        # (HIDDEN, Z_DIM+1)

    # ---- pass 1: batch statistics; per-core partials, serial over batch tiles per core ----
    stats = pl.pallas_call(
        _stats_kernel,
        out_shape=jax.ShapeDtypeStruct((2, HIDDEN, 2), jnp.float32),
        grid=(2, nt_half),
        in_specs=[
            pl.BlockSpec((Z_DIM, tb), lambda c, j: (0, c * nt_half + j)),
            pl.BlockSpec((HIDDEN, Z_DIM + 1), lambda c, j: (0, 0)),
        ],
        out_specs=pl.BlockSpec((None, HIDDEN, 2), lambda c, j: (c, 0, 0)),  # resident per core
        compiler_params=pltpu.CompilerParams(
            dimension_semantics=("parallel", "arbitrary"),
            vmem_limit_bytes=VMEM_LIMIT_BYTES),
    )(xt, w1b1)

    # Combine per-core partials and remove the analytic contribution of padded zero columns:
    # each padded column yields h = LeakyReLU(b1) per feature.
    s1 = stats[0, :, 0] + stats[1, :, 0]
    s2 = stats[0, :, 1] + stats[1, :, 1]
    pad_cols = b_pad - B
    if pad_cols:
        c0 = jnp.maximum(b1, LEAKY_SLOPE * b1).astype(jnp.float32)
        s1 = s1 - pad_cols * c0
        s2 = s2 - pad_cols * (c0 * c0)

    # Fold training-mode BatchNorm1d into Linear2 (tiny (15,)-vector math, jit-fused glue):
    #   bn(h) = h*scale + shift,  scale = gamma/sqrt(var+eps),  shift = beta - mean*scale
    #   W2 @ bn(h) + b2 = (W2 * scale) @ h + (W2 @ shift + b2)
    mean = s1 / B
    var = s2 / B - mean * mean                       # biased variance (BN training mode)
    scale = gamma * jax.lax.rsqrt(var + BN_EPS)
    shift = beta - mean * scale
    w2f = w2 * scale[None, :]
    b2f = w2 @ shift + b2
    w2b2 = jnp.concatenate([w2f, b2f[:, None]], axis=1).astype(jnp.float32)      # (OUT, HIDDEN+1)

    # ---- pass 2: Linear1+LeakyReLU (recompute) + folded BN/Linear2 + tanh ------------------
    out_t = pl.pallas_call(
        _apply_kernel,
        out_shape=jax.ShapeDtypeStruct((OUTPUT_DIM, b_pad), jnp.float32),
        grid=(nt,),
        in_specs=[
            pl.BlockSpec((Z_DIM, tb), lambda j: (0, j)),
            pl.BlockSpec((HIDDEN, Z_DIM + 1), lambda j: (0, 0)),
            pl.BlockSpec((OUTPUT_DIM, HIDDEN + 1), lambda j: (0, 0)),
        ],
        out_specs=pl.BlockSpec((OUTPUT_DIM, tb), lambda j: (0, j)),
        compiler_params=pltpu.CompilerParams(
            dimension_semantics=("parallel",),       # shards across the 2 TCs on v7x
            vmem_limit_bytes=VMEM_LIMIT_BYTES),
    )(xt, w1b1, w2b2)

    return out_t[:, :B]


@functools.partial(jax.jit, static_argnames=("tile_b",))
def generator_forward_t(xt, params, *, tile_b=DEFAULT_TILE_B):
    """Lane-dense API: xt (Z_DIM, B) -> (OUTPUT_DIM, B). Avoids the wrapper transposes."""
    return _forward_lanes(xt, params, tile_b=tile_b)


@functools.partial(jax.jit, static_argnames=("tile_b",))
def generator_forward(x, params, *, tile_b=DEFAULT_TILE_B):
    """PyTorch-layout API: x (B, Z_DIM) -> (B, OUTPUT_DIM).  params in PyTorch layout:
       w1 (HIDDEN, Z_DIM), b1 (HIDDEN,), gamma (HIDDEN,), beta (HIDDEN,),
       w2 (OUTPUT_DIM, HIDDEN), b2 (OUTPUT_DIM,)."""
    return _forward_lanes(x.T, params, tile_b=tile_b).T


def init_params(key):
    # PyTorch Linear default init: U(-1/sqrt(fan_in), 1/sqrt(fan_in)); BN gamma=1, beta=0.
    k1, k2, k3, k4 = jax.random.split(key, 4)
    lim1 = 1.0 / (Z_DIM ** 0.5)
    lim2 = 1.0 / (HIDDEN ** 0.5)
    w1 = jax.random.uniform(k1, (HIDDEN, Z_DIM), jnp.float32, -lim1, lim1)
    b1 = jax.random.uniform(k2, (HIDDEN,), jnp.float32, -lim1, lim1)
    gamma = jnp.ones((HIDDEN,), jnp.float32)
    beta = jnp.zeros((HIDDEN,), jnp.float32)
    w2 = jax.random.uniform(k3, (OUTPUT_DIM, HIDDEN), jnp.float32, -lim2, lim2)
    b2 = jax.random.uniform(k4, (OUTPUT_DIM,), jnp.float32, -lim2, lim2)
    return (w1, b1, gamma, beta, w2, b2)


def reference_forward(x, params):
    # Pure-JAX reference matching PyTorch semantics (training-mode BatchNorm1d).
    w1, b1, gamma, beta, w2, b2 = params
    h = x @ w1.T + b1
    h = jnp.where(h > 0, h, LEAKY_SLOPE * h)
    mean = jnp.mean(h, axis=0)
    var = jnp.mean((h - mean) ** 2, axis=0)
    h = (h - mean) * jax.lax.rsqrt(var + BN_EPS) * gamma + beta
    return jnp.tanh(h @ w2.T + b2)


if __name__ == "__main__":
    key = jax.random.PRNGKey(0)
    kx, kp = jax.random.split(key)

    batch = 200                       # non-multiple of 128: exercises padding + analytic fix
    x = jax.random.normal(kx, (batch, Z_DIM), jnp.float32)   # latent noise z
    params = init_params(kp)

    out = generator_forward(x, params)            # tb clamps to 256; 2 tiles, 1 per TC in pass 1
    out = jax.block_until_ready(out)

    ref = reference_forward(x, params)
    assert out.shape == (batch, OUTPUT_DIM)
    # f32 tolerance: BN stats are accumulated tile-by-tile (with an analytic padding
    # correction) and folded into Linear2, so reduction order differs from the reference.
    assert jnp.allclose(out, ref, atol=1e-4, rtol=1e-4), "mismatch vs JAX reference"

    print("KERNEL_OK")
</pallas_src>

<mosaic_0001>
module attributes {stable_mosaic.version = 11 : i64} {
  func.func @_stats_kernel(%arg0: i32, %arg1: i32, %arg2: memref<5x256xf32, #tpu.memory_space<vmem>>, %arg3: memref<15x6xf32, #tpu.memory_space<vmem>>, %arg4: memref<1x15x2xf32, #tpu.memory_space<vmem>>) attributes {dimension_semantics = [#tpu.dimension_semantics<parallel>, #tpu.dimension_semantics<arbitrary>], iteration_bounds = array<i64: 2, 1>, scalar_prefetch = 0 : i64, scratch_operands = 0 : i64, tpu.core_type = #tpu.core_type<tc>, window_params = [{transform_indices = @transform_0, window_bounds = array<i64: 5, 256>}, {pipeline_mode = #tpu.pipeline_mode<synchronous>, transform_indices = @transform_1, window_bounds = array<i64: 15, 6>}, {transform_indices = @transform_2, window_bounds = array<i64: 1, 15, 2>}]} {
    %c0_i32 = arith.constant 0 : i32
    %0 = arith.cmpi eq, %arg1, %c0_i32 : i32
    %1 = arith.extui %0 : i1 to i32
    %c0_i32_0 = arith.constant 0 : i32
    %2 = arith.cmpi ne, %1, %c0_i32_0 : i32
    scf.if %2 {
      %cst_19 = arith.constant 0.000000e+00 : f32
      %29 = vector.broadcast %cst_19 : f32 to vector<15x2xf32>
      %c0_20 = arith.constant 0 : index
      %c0_21 = arith.constant 0 : index
      %c0_22 = arith.constant 0 : index
      %30 = vector.load %arg4[%c0_20, %c0_21, %c0_22] : memref<1x15x2xf32, #tpu.memory_space<vmem>>, vector<1x15x2xf32>
      %31 = vector.shape_cast %30 : vector<1x15x2xf32> to vector<15x2xf32>
      %32 = vector.shape_cast %29 : vector<15x2xf32> to vector<1x15x2xf32>
      tpu.vector_store %arg4[%c0_20, %c0_21, %c0_22], %32 {strides = array<i32>} : memref<1x15x2xf32, #tpu.memory_space<vmem>>, vector<1x15x2xf32>,
    } else {
    }
    %c0 = arith.constant 0 : index
    %c0_1 = arith.constant 0 : index
    %3 = vector.load %arg2[%c0, %c0_1] : memref<5x256xf32, #tpu.memory_space<vmem>>, vector<5x256xf32>
    %c0_2 = arith.constant 0 : index
    %c0_3 = arith.constant 0 : index
    %4 = vector.load %arg3[%c0_2, %c0_3] : memref<15x6xf32, #tpu.memory_space<vmem>>, vector<15x5xf32>
    %c0_4 = arith.constant 0 : index
    %c5 = arith.constant 5 : index
    %5 = vector.load %arg3[%c0_4, %c5] : memref<15x6xf32, #tpu.memory_space<vmem>>, vector<15x1xf32>
    %cst = arith.constant dense<0.000000e+00> : vector<15x256xf32>
    %6 = tpu.matmul %4, %3, %cst {dimension_numbers = #tpu.dot_dimension_numbers<[1], [0], [0], [1], [0, 0, 1, 1], [], []>} : vector<15x5xf32>, vector<5x256xf32>, vector<15x256xf32> -> vector<15x256xf32>
    %7 = vector.broadcast %5 : vector<15x1xf32> to vector<15x256xf32>
    %8 = arith.addf %6, %7 : vector<15x256xf32>
    %cst_5 = arith.constant 2.000000e-01 : f32
    %9 = vector.broadcast %cst_5 : f32 to vector<15x256xf32>
    %10 = arith.mulf %9, %8 : vector<15x256xf32>
    %11 = arith.maximumf %8, %10 : vector<15x256xf32>
    %c0_6 = arith.constant 0 : index
    %c0_7 = arith.constant 0 : index
    %c0_8 = arith.constant 0 : index
    %12 = vector.load %arg4[%c0_6, %c0_7, %c0_8] : memref<1x15x2xf32, #tpu.memory_space<vmem>>, vector<1x15x1xf32>
    %13 = vector.shape_cast %12 : vector<1x15x1xf32> to vector<15x1xf32>
    %cst_9 = arith.constant dense<0.000000e+00> : vector<15xf32>
    %14 = vector.multi_reduction <add>, %11, %cst_9 [1] : vector<15x256xf32> to vector<15xf32>
    %15 = vector.shape_cast %14 : vector<15xf32> to vector<15x1xf32>
    %16 = arith.addf %13, %15 : vector<15x1xf32>
    %c0_10 = arith.constant 0 : index
    %c0_11 = arith.constant 0 : index
    %c0_12 = arith.constant 0 : index
    %17 = vector.load %arg4[%c0_10, %c0_11, %c0_12] : memref<1x15x2xf32, #tpu.memory_space<vmem>>, vector<1x15x1xf32>
    %18 = vector.shape_cast %17 : vector<1x15x1xf32> to vector<15x1xf32>
    %19 = vector.shape_cast %16 : vector<15x1xf32> to vector<1x15x1xf32>
    tpu.vector_store %arg4[%c0_10, %c0_11, %c0_12], %19 {strides = array<i32>} : memref<1x15x2xf32, #tpu.memory_space<vmem>>, vector<1x15x1xf32>,
    %c0_13 = arith.constant 0 : index
    %c0_14 = arith.constant 0 : index
    %c1 = arith.constant 1 : index
    %20 = vector.load %arg4[%c0_13, %c0_14, %c1] : memref<1x15x2xf32, #tpu.memory_space<vmem>>, vector<1x15x1xf32>
    %21 = vector.shape_cast %20 : vector<1x15x1xf32> to vector<15x1xf32>
    %22 = arith.mulf %11, %11 : vector<15x256xf32>
    %cst_15 = arith.constant dense<0.000000e+00> : vector<15xf32>
    %23 = vector.multi_reduction <add>, %22, %cst_15 [1] : vector<15x256xf32> to vector<15xf32>
    %24 = vector.shape_cast %23 : vector<15xf32> to vector<15x1xf32>
    %25 = arith.addf %21, %24 : vector<15x1xf32>
    %c0_16 = arith.constant 0 : index
    %c0_17 = arith.constant 0 : index
    %c1_18 = arith.constant 1 : index
    %26 = vector.load %arg4[%c0_16, %c0_17, %c1_18] : memref<1x15x2xf32, #tpu.memory_space<vmem>>, vector<1x15x1xf32>
    %27 = vector.shape_cast %26 : vector<1x15x1xf32> to vector<15x1xf32>
    %28 = vector.shape_cast %25 : vector<15x1xf32> to vector<1x15x1xf32>
    tpu.vector_store %arg4[%c0_16, %c0_17, %c1_18], %28 {strides = array<i32>} : memref<1x15x2xf32, #tpu.memory_space<vmem>>, vector<1x15x1xf32>,
    return
  }
  func.func @transform_0(%arg0: i32, %arg1: i32) -> (i32, i32) {
    %c1_i32 = arith.constant 1 : i32
    %0 = arith.muli %arg0, %c1_i32 : i32
    %1 = arith.addi %0, %arg1 : i32
    %c0_i32 = arith.constant 0 : i32
    %c0_i32_0 = arith.constant 0 : i32
    return %c0_i32, %1 : i32, i32
  }
  func.func @transform_1(%arg0: i32, %arg1: i32) -> (i32, i32) {
    %c0_i32 = arith.constant 0 : i32
    %c0_i32_0 = arith.constant 0 : i32
    %c0_i32_1 = arith.constant 0 : i32
    return %c0_i32, %c0_i32_0 : i32, i32
  }
  func.func @transform_2(%arg0: i32, %arg1: i32) -> (i32, i32, i32) {
    %c0_i32 = arith.constant 0 : i32
    %c0_i32_0 = arith.constant 0 : i32
    %c0_i32_1 = arith.constant 0 : i32
    return %arg0, %c0_i32, %c0_i32_0 : i32, i32, i32
  }
}

module attributes {stable_mosaic.version = 11 : i64} {
  func.func @_apply_kernel(%arg0: i32, %arg1: memref<5x256xf32, #tpu.memory_space<vmem>>, %arg2: memref<15x6xf32, #tpu.memory_space<vmem>>, %arg3: memref<2x16xf32, #tpu.memory_space<vmem>>, %arg4: memref<2x256xf32, #tpu.memory_space<vmem>>) attributes {dimension_semantics = [#tpu.dimension_semantics<parallel>], iteration_bounds = array<i64: 2>, scalar_prefetch = 0 : i64, scratch_operands = 0 : i64, tpu.core_type = #tpu.core_type<tc>, window_params = [{transform_indices = @transform_0, window_bounds = array<i64: 5, 256>}, {pipeline_mode = #tpu.pipeline_mode<synchronous>, transform_indices = @transform_1, window_bounds = array<i64: 15, 6>}, {pipeline_mode = #tpu.pipeline_mode<synchronous>, transform_indices = @transform_2, window_bounds = array<i64: 2, 16>}, {transform_indices = @transform_3, window_bounds = array<i64: 2, 256>}]} {
    %c0 = arith.constant 0 : index
    %c0_0 = arith.constant 0 : index
    %0 = vector.load %arg1[%c0, %c0_0] : memref<5x256xf32, #tpu.memory_space<vmem>>, vector<5x256xf32>
    %c0_1 = arith.constant 0 : index
    %c0_2 = arith.constant 0 : index
    %1 = vector.load %arg2[%c0_1, %c0_2] : memref<15x6xf32, #tpu.memory_space<vmem>>, vector<15x5xf32>
    %c0_3 = arith.constant 0 : index
    %c5 = arith.constant 5 : index
    %2 = vector.load %arg2[%c0_3, %c5] : memref<15x6xf32, #tpu.memory_space<vmem>>, vector<15x1xf32>
    %cst = arith.constant dense<0.000000e+00> : vector<15x256xf32>
    %3 = tpu.matmul %1, %0, %cst {dimension_numbers = #tpu.dot_dimension_numbers<[1], [0], [0], [1], [0, 0, 1, 1], [], []>} : vector<15x5xf32>, vector<5x256xf32>, vector<15x256xf32> -> vector<15x256xf32>
    %4 = vector.broadcast %2 : vector<15x1xf32> to vector<15x256xf32>
    %5 = arith.addf %3, %4 : vector<15x256xf32>
    %cst_4 = arith.constant 2.000000e-01 : f32
    %6 = vector.broadcast %cst_4 : f32 to vector<15x256xf32>
    %7 = arith.mulf %6, %5 : vector<15x256xf32>
    %8 = arith.maximumf %5, %7 : vector<15x256xf32>
    %c0_5 = arith.constant 0 : index
    %c0_6 = arith.constant 0 : index
    %9 = vector.load %arg3[%c0_5, %c0_6] : memref<2x16xf32, #tpu.memory_space<vmem>>, vector<2x15xf32>
    %c0_7 = arith.constant 0 : index
    %c15 = arith.constant 15 : index
    %10 = vector.load %arg3[%c0_7, %c15] : memref<2x16xf32, #tpu.memory_space<vmem>>, vector<2x1xf32>
    %cst_8 = arith.constant dense<0.000000e+00> : vector<2x256xf32>
    %11 = tpu.matmul %9, %8, %cst_8 {dimension_numbers = #tpu.dot_dimension_numbers<[1], [0], [0], [1], [0, 0, 1, 1], [], []>} : vector<2x15xf32>, vector<15x256xf32>, vector<2x256xf32> -> vector<2x256xf32>
    %12 = vector.broadcast %10 : vector<2x1xf32> to vector<2x256xf32>
    %13 = arith.addf %11, %12 : vector<2x256xf32>
    %14 = math.tanh %13 : vector<2x256xf32>
    %c0_9 = arith.constant 0 : index
    %c0_10 = arith.constant 0 : index
    %15 = vector.load %arg4[%c0_9, %c0_10] : memref<2x256xf32, #tpu.memory_space<vmem>>, vector<2x256xf32>
    tpu.vector_store %arg4[%c0_9, %c0_10], %14 {strides = array<i32>} : memref<2x256xf32, #tpu.memory_space<vmem>>, vector<2x256xf32>,
    return
  }
  func.func @transform_0(%arg0: i32) -> (i32, i32) {
    %c0_i32 = arith.constant 0 : i32
    %c0_i32_0 = arith.constant 0 : i32
    return %c0_i32, %arg0 : i32, i32
  }
  func.func @transform_1(%arg0: i32) -> (i32, i32) {
    %c0_i32 = arith.constant 0 : i32
    %c0_i32_0 = arith.constant 0 : i32
    %c0_i32_1 = arith.constant 0 : i32
    return %c0_i32, %c0_i32_0 : i32, i32
  }
  func.func @transform_2(%arg0: i32) -> (i32, i32) {
    %c0_i32 = arith.constant 0 : i32
    %c0_i32_0 = arith.constant 0 : i32
    %c0_i32_1 = arith.constant 0 : i32
    return %c0_i32, %c0_i32_0 : i32, i32
  }
  func.func @transform_3(%arg0: i32) -> (i32, i32) {
    %c0_i32 = arith.constant 0 : i32
    %c0_i32_0 = arith.constant 0 : i32
    return %c0_i32, %arg0 : i32, i32
  }
}

</mosaic_0001>

<llo_original>
// kernel: generator_forward.3
$region0: #{generator_forward.3}
  #allocation0 [shape = 'u32[]', space=smem, size = 0x4, offset = 0x4, fixed_abs, tag = 'smem constant byte address 0x4 - core index']
  #allocation1 [shape = 'u32[144,128]{1,0:T(1,128)}', space=vmem, size = 0x12000, scoped, tag = 'internal scratch']
  %s0 = inlined_call_operand.vmem [shape: f32[5,512], index: 0, kind: input, shape index: {}]
  %s1 = inlined_call_operand.vmem [shape: f32[15,6], index: 1, kind: input, shape index: {}]
  %s2 = inlined_call_operand.vmem [shape: f32[2,16], index: 2, kind: input, shape index: {}]
  %s3 = inlined_call_operand.vmem [shape: f32[2,512], index: 3, kind: output, shape index: {}]
  %s4 = sld [smem:[#allocation0]]
  $region45: #{generator_forward.3} parent=0
    _
  %s6 = ssub.s32 1, %s4
  %s7 = scalar_select 0, %s6, %s4
  loop: start=0, step=1, limit=4
  $region2: #{generator_forward.3} parent=0 // loop_pre_header
    _
  $region3: #{generator_forward.3} parent=0 // loop_header
    %s9 = sphi 0, %s13
    %p10 = scmp.ge.s32.totalorder %s9, 4
    %s19 = sphi 0, %s21
    %s22 = sphi 0, %s19
    %s23 = sphi 0, %s22
    %s39 = sphi 0, %s23
    %s43 = sphi 0, %s43
    %s45 = sphi 0, %s43
    %s46 = sphi 0, %s45
    %s60 = sphi 0, %s46
    %s64 = sphi 0, %s64
    %s66 = sphi 0, %s64
    %s67 = sphi 0, %s66
    %s81 = sphi 0, %s67
    %s87 = sphi 0, %s89
    %s90 = sphi 0, %s87
    %s91 = sphi 0, %s90
    %s107 = sphi 0, %s91
  $region4: #{generator_forward.3} parent=0 // loop_header_branch
    %12 = sbr.rel (%p10) target = $region8
  $region5: #{generator_forward.3} parent=0 // loop_body
    %s14 = ssub.s32 %s9, 1
    %s15 = ssub.s32 %s9, 2
    %s16 = sadd.s32 %s9, 1
    %s17 = ssub.s32 %s9, %s16
    %p18 = scmp.eq.s32.totalorder %s17, 0
    %s20 = sadd.s32 %s19, 1
    %s21 = scalar_select %p18, %s19, %s20
    %p24 = pneg %p18
    %p25 = scmp.eq.s32.totalorder %s9, 1
    %p26 = por %p24, %p25
    %p27 = scmp.ne.s32.totalorder %s19, %s22
    %p28 = scmp.eq.s32.totalorder %s9, 0
    %p29 = por %p27, %p28
    %p30 = scmp.ne.s32.totalorder %s19, %s22
    %p31 = scmp.eq.s32.totalorder %s14, 1
    %p32 = por %p30, %p31
    %p33 = scmp.ne.s32.totalorder %s22, %s23
    %p34 = scmp.eq.s32.totalorder %s14, 0
    %p35 = por %p33, %p34
    %p36 = scmp.ne.s32.totalorder %s22, %s23
    %p37 = scmp.eq.s32.totalorder %s15, 1
    %p38 = por %p36, %p37
    %p40 = scmp.ne.s32.totalorder %s23, %s39
    %p41 = scmp.eq.s32.totalorder %s15, 0
    %p42 = por %p40, %p41
    %s44 = sadd.s32 %s43, 1
    %p47 = scmp.eq.s32.totalorder %s9, 1
    %p48 = scmp.ne.s32.totalorder %s43, %s45
    %p49 = scmp.eq.s32.totalorder %s9, 0
    %p50 = por %p48, %p49
    %p51 = scmp.ne.s32.totalorder %s43, %s45
    %p52 = scmp.eq.s32.totalorder %s14, 1
    %p53 = por %p51, %p52
    %p54 = scmp.ne.s32.totalorder %s45, %s46
    %p55 = scmp.eq.s32.totalorder %s14, 0
    %p56 = por %p54, %p55
    %p57 = scmp.ne.s32.totalorder %s45, %s46
    %p58 = scmp.eq.s32.totalorder %s15, 1
    %p59 = por %p57, %p58
    %p61 = scmp.ne.s32.totalorder %s46, %s60
    %p62 = scmp.eq.s32.totalorder %s15, 0
    %p63 = por %p61, %p62
    %s65 = sadd.s32 %s64, 1
    %p68 = scmp.eq.s32.totalorder %s9, 1
    %p69 = scmp.ne.s32.totalorder %s64, %s66
    %p70 = scmp.eq.s32.totalorder %s9, 0
    %p71 = por %p69, %p70
    %p72 = scmp.ne.s32.totalorder %s64, %s66
    %p73 = scmp.eq.s32.totalorder %s14, 1
    %p74 = por %p72, %p73
    %p75 = scmp.ne.s32.totalorder %s66, %s67
    %p76 = scmp.eq.s32.totalorder %s14, 0
    %p77 = por %p75, %p76
    %p78 = scmp.ne.s32.totalorder %s66, %s67
    %p79 = scmp.eq.s32.totalorder %s15, 1
    %p80 = por %p78, %p79
    %p82 = scmp.ne.s32.totalorder %s67, %s81
    %p83 = scmp.eq.s32.totalorder %s15, 0
    %p84 = por %p82, %p83
    %s85 = ssub.s32 %s9, %s16
    %p86 = scmp.eq.s32.totalorder %s85, 0
    %s88 = sadd.s32 %s87, 1
    %s89 = scalar_select %p86, %s87, %s88
    %p92 = pneg %p86
    %p93 = scmp.eq.s32.totalorder %s9, 1
    %p94 = por %p92, %p93
    %p95 = scmp.ne.s32.totalorder %s87, %s90
    %p96 = scmp.eq.s32.totalorder %s9, 0
    %p97 = por %p95, %p96
    %p98 = scmp.ne.s32.totalorder %s87, %s90
    %p99 = scmp.eq.s32.totalorder %s14, 1
    %p100 = por %p98, %p99
    %p101 = scmp.ne.s32.totalorder %s90, %s91
    %p102 = scmp.eq.s32.totalorder %s14, 0
    %p103 = por %p101, %p102
    %p104 = scmp.ne.s32.totalorder %s90, %s91
    %p105 = scmp.eq.s32.totalorder %s15, 1
    %p106 = por %p104, %p105
    %p108 = scmp.ne.s32.totalorder %s91, %s107
    %p109 = scmp.eq.s32.totalorder %s15, 0
    %p110 = por %p108, %p109
    %p111 = scmp.le.s32.totalorder 1, %s9
    %p112 = scmp.lt.s32.totalorder %s9, 3
    %p113 = pnand %p111, %p112
    %p114 = pneg %p113
    // Predicated region
    $region9: #{generator_forward.3} parent=5 // pred_check
      _
    $region10: #{generator_forward.3} parent=5 // pred_check_branch
      %116 = sbr.rel (%p113) target = $region12
    $region11: #{generator_forward.3} parent=5 // pred_region
      %s117 = ssub.s32 %s9, 1
      // Predicated region
      $region13: #{generator_forward.3} parent=11 // pred_check
        %p118 = pneg %p56
      $region14: #{generator_forward.3} parent=11 // pred_check_branch
        %120 = sbr.rel (%p118) target = $region16
      $region15: #{generator_forward.3} parent=11 // pred_region
        _
      $region16: #{generator_forward.3} parent=11 // pred_fallthru
        _
      // Predicated region
      $region17: #{generator_forward.3} parent=11 // pred_check
        %p121 = pneg %p77
      $region18: #{generator_forward.3} parent=11 // pred_check_branch
        %123 = sbr.rel (%p121) target = $region20
      $region19: #{generator_forward.3} parent=11 // pred_region
        _
      $region20: #{generator_forward.3} parent=11 // pred_fallthru
        _
    $region12: #{generator_forward.3} parent=5 // pred_fallthru
      _
    %p124 = scmp.lt.s32.totalorder %s9, 2
    // Predicated region
    $region21: #{generator_forward.3} parent=5 // pred_check
      %p125 = pneg %p124
    $region22: #{generator_forward.3} parent=5 // pred_check_branch
      %127 = sbr.rel (%p125) target = $region24
    $region23: #{generator_forward.3} parent=5 // pred_region
      // Predicated region
      $region25: #{generator_forward.3} parent=23 // pred_check
        %p128 = pneg %p29
      $region26: #{generator_forward.3} parent=23 // pred_check_branch
        %130 = sbr.rel (%p128) target = $region28
      $region27: #{generator_forward.3} parent=23 // pred_region
        %s131 = smul.u32 2, %s9
        %p132 = scmp.lt.s32.totalorder %s131, 3
        %s133 = scalar_select %p132, %s131, 3
        %s134 = smul.addr %s133, 8
        %s135 = scalar_lea.vmem %s0, %s134
        %s136 = smul.u32 2, %s9
      $region28: #{generator_forward.3} parent=23 // pred_fallthru
        _
    $region24: #{generator_forward.3} parent=5 // pred_fallthru
      _
    %p137 = scmp.le.s32.totalorder 1, %s9
    %p138 = scmp.lt.s32.totalorder %s9, 3
    %p139 = pnand %p137, %p138
    %p140 = pneg %p139
    // Predicated region
    $region29: #{generator_forward.3} parent=5 // pred_check
      _
    $region30: #{generator_forward.3} parent=5 // pred_check_branch
      %142 = sbr.rel (%p139) target = $region32
    $region31: #{generator_forward.3} parent=5 // pred_region
      %s143 = ssub.s32 %s9, 1
      %s144 = smul.u32 2, %s14
      %p145 = scmp.lt.s32.totalorder %s144, 3
      %s146 = scalar_select %p145, %s144, 3
      %s147 = smul.addr %s146, 8
      %s148 = scalar_lea.vmem %s0, %s147
      %p149 = pneg %p35
      %p150 = pneg %p32
      %p151 = pneg %p56
      %p152 = pneg %p53
      %p153 = pneg %p77
      %p154 = pneg %p74
      %p155 = pneg %p103
      %p156 = pneg %p100
      %s157 = smul.u32 2, %s14
      %p158 = scmp.lt.s32.totalorder %s157, 3
      %s159 = scalar_select %p158, %s157, 3
      %s160 = smul.addr %s159, 2
      %s161 = scalar_lea.vmem %s3, %s160
      %s162 = smul.u32 2, %s14
      %p163 = scmp.lt.s32.totalorder %s162, 3
      %s164 = scalar_select %p163, %s162, 3
      %s165 = smul.addr %s164, 8
      %s166 = scalar_lea.vmem %s0, %s165
      %s167 = smul.u32 2, %s14
      %s168 = smul.u32 2, %s14
      %p169 = scmp.lt.s32.totalorder %s168, 3
      %s170 = scalar_select %p169, %s168, 3
      %s171 = smul.addr %s170, 2
      %s172 = scalar_lea.vmem %s3, %s171
      %s173 = smul.u32 2, %s14
      %v174 = vld [vmem:[%s166] sm:$0x1f]
      %v175 = vld [vmem:[%s166 + $0x8] sm:$0x1f]
      %v176 = vld [vmem:[%s1] sm:$0xff]
      %v177 = vld [vmem:[%s1 + $0x8] sm:$0x7f]
      %179 = vset.pattern.permute.xlu0 5
      %180 = vperm.xlu0 %179, %v176
      %v181 = vpop.permute.xlu0 %180
      %184 = vset.pattern.permute.xlu0 5
      %185 = vperm.xlu0 %184, %v177
      %v186 = vpop.permute.xlu0 %185
      %vm188 = vcmask 39936
      %v189 = vsel %vm188, %v176, 0
      %v191 = vsel %vm188, %v177, 0
      %vm193 = vcmask 1044480
      %v195 = vsel %vm193, %v174, 0
      %v198 = vsel %vm193, %v175, 0
      %200 = vmatprep.subr.mxu0 %v198
      %201 = vmatpush1.msra.mxu0 %v195
      %202 = vmatprep.subr.mxu0 0.0
      %203 = vmatpush1.msra.mxu0 0.0
      %204 = vmatprep.subr.mxu0 0.0
      %205 = vmatpush1.msra.mxu0 0.0
      %206 = vmatprep.subr.mxu0 0.0
      %207 = vmatpush1.msra.mxu0 0.0
      %208 = vmatprep.subr.mxu0 0.0
      %209 = vmatpush1.msra.mxu0 0.0
      %210 = vmatprep.subr.mxu0 0.0
      %211 = vmatpush1.msra.mxu0 0.0
      %212 = vmatprep.subr.mxu0 0.0
      %213 = vmatpush1.msra.mxu0 0.0
      %214 = vmatprep.subr.mxu0 0.0
      %215 = vmatpush1.msra.mxu0 0.0
      %216 = vmatprep.subr.mxu0 0.0
      %217 = vmatpush1.msra.mxu0 0.0
      %218 = vmatprep.subr.mxu0 0.0
      %219 = vmatpush1.msra.mxu0 0.0
      %220 = vmatprep.subr.mxu0 0.0
      %221 = vmatpush1.msra.mxu0 0.0
      %222 = vmatprep.subr.mxu0 0.0
      %223 = vmatpush1.msra.mxu0 0.0
      %224 = vmatprep.subr.mxu0 0.0
      %225 = vmatpush1.msra.mxu0 0.0
      %226 = vmatprep.subr.mxu0 0.0
      %227 = vmatpush1.msra.mxu0 0.0
      %228 = vmatprep.subr.mxu0 0.0
      %229 = vmatpush1.msra.mxu0 0.0
      %230 = vmatprep.subr.mxu0 0.0
      %231 = vmatpush1.msra.mxu0 0.0
      %232 = vmatprep.subr.mxu0 0.0
      %233 = vmatpush1.msra.mxu0 0.0
      %234 = vmatprep.subr.mxu0 0.0
      %235 = vmatpush1.msra.mxu0 0.0
      %236 = vmatprep.subr.mxu0 0.0
      %237 = vmatpush1.msra.mxu0 0.0
      %238 = vmatprep.subr.mxu0 0.0
      %239 = vmatpush1.msra.mxu0 0.0
      %240 = vmatprep.subr.mxu0 0.0
      %241 = vmatpush1.msra.mxu0 0.0
      %242 = vmatprep.subr.mxu0 0.0
      %243 = vmatpush1.msra.mxu0 0.0
      %244 = vmatprep.subr.mxu0 0.0
      %245 = vmatpush1.msra.mxu0 0.0
      %246 = vmatprep.subr.mxu0 0.0
      %247 = vmatpush1.msra.mxu0 0.0
      %248 = vmatprep.subr.mxu0 0.0
      %249 = vmatpush1.msra.mxu0 0.0
      %250 = vmatprep.subr.mxu0 0.0
      %251 = vmatpush1.msra.mxu0 0.0
      %252 = vmatprep.subr.mxu0 0.0
      %253 = vmatpush1.msra.mxu0 0.0
      %254 = vmatprep.subr.mxu0 0.0
      %255 = vmatpush1.msra.mxu0 0.0
      %256 = vmatprep.subr.mxu0 0.0
      %257 = vmatpush1.msra.mxu0 0.0
      %258 = vmatprep.subr.mxu0 0.0
      %259 = vmatpush1.msra.mxu0 0.0
      %260 = vmatprep.subr.mxu0 0.0
      %261 = vmatpush1.msra.mxu0 0.0
      %262 = vmatprep.subr.mxu0 0.0
      %263 = vmatpush1.msra.mxu0 0.0
      %264 = vmatprep.mubr.f32.mxu0 0.0
      %265 = vmatmul.mubr.f32.gmra.mrb[0].mxu0 %v189
      %v266 = vpop.f32.mrb[0].mxu0
      %v267 = vadd.f32 %v181, %v266
      %v268 = vpop.f32.mrb[0].mxu0
      %v269 = vadd.f32 %v181, %v268
      %270 = vmatprep.mubr.f32.mxu0 0.0
      %271 = vmatmul.mubr.f32.gmra.mrb[0].mxu0 %v191
      %v272 = vpop.f32.mrb[0].mxu0
      %v273 = vadd.f32 %v186, %v272
      %v274 = vpop.f32.mrb[0].mxu0
      %v275 = vadd.f32 %v186, %v274
      %276 = vdwg.mxu0
      %v277 = vmul.f32 %v267, 0.2
      %v278 = vmul.f32 %v269, 0.2
      %v279 = vmul.f32 %v273, 0.2
      %v280 = vmul.f32 %v275, 0.2
      %v281 = vmax.f32 %v267, %v277
      %v282 = vmax.f32 %v269, %v278
      %v283 = vmax.f32 %v273, %v279
      %v284 = vmax.f32 %v275, %v280
      %v285 = vld [vmem:[%s2] sm:$0x3]
      %287 = vset.pattern.permute.xlu0 15
      %288 = vperm.xlu0 %287, %v285
      %v289 = vpop.permute.xlu0 %288
      %vm291 = vcmask 121856
      %v292 = vsel %vm291, %v285, 0
      %vm294 = vcmask 1046528
      %v296 = vsel %vm294, %v283, 0
      %v299 = vsel %vm294, %v284, 0
      %301 = vmatprep.subr.mxu0 %v282
      %302 = vmatpush1.msra.mxu0 %v281
      %303 = vmatprep.subr.mxu0 %v299
      %304 = vmatpush1.msra.mxu0 %v296
      %305 = vmatprep.subr.mxu0 0.0
      %306 = vmatpush1.msra.mxu0 0.0
      %307 = vmatprep.subr.mxu0 0.0
      %308 = vmatpush1.msra.mxu0 0.0
      %309 = vmatprep.subr.mxu0 0.0
      %310 = vmatpush1.msra.mxu0 0.0
      %311 = vmatprep.subr.mxu0 0.0
      %312 = vmatpush1.msra.mxu0 0.0
      %313 = vmatprep.subr.mxu0 0.0
      %314 = vmatpush1.msra.mxu0 0.0
      %315 = vmatprep.subr.mxu0 0.0
      %316 = vmatpush1.msra.mxu0 0.0
      %317 = vmatprep.subr.mxu0 0.0
      %318 = vmatpush1.msra.mxu0 0.0
      %319 = vmatprep.subr.mxu0 0.0
      %320 = vmatpush1.msra.mxu0 0.0
      %321 = vmatprep.subr.mxu0 0.0
      %322 = vmatpush1.msra.mxu0 0.0
      %323 = vmatprep.subr.mxu0 0.0
      %324 = vmatpush1.msra.mxu0 0.0
      %325 = vmatprep.subr.mxu0 0.0
      %326 = vmatpush1.msra.mxu0 0.0
      %327 = vmatprep.subr.mxu0 0.0
      %328 = vmatpush1.msra.mxu0 0.0
      %329 = vmatprep.subr.mxu0 0.0
      %330 = vmatpush1.msra.mxu0 0.0
      %331 = vmatprep.subr.mxu0 0.0
      %332 = vmatpush1.msra.mxu0 0.0
      %333 = vmatprep.subr.mxu0 0.0
      %334 = vmatpush1.msra.mxu0 0.0
      %335 = vmatprep.subr.mxu0 0.0
      %336 = vmatpush1.msra.mxu0 0.0
      %337 = vmatprep.subr.mxu0 0.0
      %338 = vmatpush1.msra.mxu0 0.0
      %339 = vmatprep.subr.mxu0 0.0
      %340 = vmatpush1.msra.mxu0 0.0
      %341 = vmatprep.subr.mxu0 0.0
      %342 = vmatpush1.msra.mxu0 0.0
      %343 = vmatprep.subr.mxu0 0.0
      %344 = vmatpush1.msra.mxu0 0.0
      %345 = vmatprep.subr.mxu0 0.0
      %346 = vmatpush1.msra.mxu0 0.0
      %347 = vmatprep.subr.mxu0 0.0
      %348 = vmatpush1.msra.mxu0 0.0
      %349 = vmatprep.subr.mxu0 0.0
      %350 = vmatpush1.msra.mxu0 0.0
      %351 = vmatprep.subr.mxu0 0.0
      %352 = vmatpush1.msra.mxu0 0.0
      %353 = vmatprep.subr.mxu0 0.0
      %354 = vmatpush1.msra.mxu0 0.0
      %355 = vmatprep.subr.mxu0 0.0
      %356 = vmatpush1.msra.mxu0 0.0
      %357 = vmatprep.subr.mxu0 0.0
      %358 = vmatpush1.msra.mxu0 0.0
      %359 = vmatprep.subr.mxu0 0.0
      %360 = vmatpush1.msra.mxu0 0.0
      %361 = vmatprep.subr.mxu0 0.0
      %362 = vmatpush1.msra.mxu0 0.0
      %363 = vmatprep.subr.mxu0 0.0
      %364 = vmatpush1.msra.mxu0 0.0
      %365 = vmatprep.mubr.f32.mxu0 0.0
      %366 = vmatmul.mubr.f32.gmra.mrb[0].mxu0 %v292
      %v367 = vpop.f32.mrb[0].mxu0
      %v368 = vadd.f32 %v289, %v367
      %v369 = vpop.f32.mrb[0].mxu0
      %v370 = vadd.f32 %v289, %v369
      %371 = vdwg.mxu0
      %v372 = vtanh.pop %v368
      %v373 = vtanh.pop %v370
      %v376 = vcombine.low %v372, %v373
      %v378 = vunpack.c.l.s4 1983009808
      %v379 = vunpack.c.0.s8 %v378
      %v380 = vlaneseq
      %v381 = vshrl.u32 %v380, 7
      %v382 = vsub.s32 %v379, %v381
      %v383 = vrot.slane %v376, %v382
      %385 = vst [vmem:[%s172] sm:$0xf] %v383
      %s386 = smul.u32 2, %s14
      %p387 = scmp.lt.s32.totalorder %s386, 3
      %s388 = scalar_select %p387, %s386, 3
      %s389 = smul.addr %s388, 2
      %s390 = scalar_lea.vmem %s3, %s389
      // Predicated region
      $region33: #{generator_forward.3} parent=31 // pred_check
        %p391 = pneg %p100
      $region34: #{generator_forward.3} parent=31 // pred_check_branch
        %393 = sbr.rel (%p391) target = $region36
      $region35: #{generator_forward.3} parent=31 // pred_region
        %s394 = smul.u32 2, %s14
      $region36: #{generator_forward.3} parent=31 // pred_fallthru
        _
    $region32: #{generator_forward.3} parent=5 // pred_fallthru
      _
    %p395 = scmp.le.s32.totalorder 2, %s9
    // Predicated region
    $region37: #{generator_forward.3} parent=5 // pred_check
      %p396 = pneg %p395
    $region38: #{generator_forward.3} parent=5 // pred_check_branch
      %398 = sbr.rel (%p396) target = $region40
    $region39: #{generator_forward.3} parent=5 // pred_region
      %s399 = ssub.s32 %s9, 2
      // Predicated region
      $region41: #{generator_forward.3} parent=39 // pred_check
        %p400 = pneg %p106
      $region42: #{generator_forward.3} parent=39 // pred_check_branch
        %402 = sbr.rel (%p400) target = $region44
      $region43: #{generator_forward.3} parent=39 // pred_region
        %s403 = smul.u32 2, %s15
        %p404 = scmp.lt.s32.totalorder %s403, 3
        %s405 = scalar_select %p404, %s403, 3
        %s406 = smul.addr %s405, 2
        %s407 = scalar_lea.vmem %s3, %s406
      $region44: #{generator_forward.3} parent=39 // pred_fallthru
        _
    $region40: #{generator_forward.3} parent=5 // pred_fallthru
      _
  $region6: #{generator_forward.3} parent=0 // loop_footer
    %s13 = sadd.s32 1, %s9
  $region7: #{generator_forward.3} parent=0 // loop_footer_branch
    %8 = sbr.rel target = $region3
  $region8: #{generator_forward.3} parent=0 // loop_exit
    _

// kernel: generator_forward.2
$region0: #{generator_forward.2}
  #allocation0 [shape = 'u32[]', space=smem, size = 0x4, offset = 0x4, fixed_abs, tag = 'smem constant byte address 0x4 - core index']
  #allocation1 [shape = 'u32[144,128]{1,0:T(1,128)}', space=vmem, size = 0x12000, scoped, tag = 'internal scratch']
  %s0 = inlined_call_operand.vmem [shape: f32[5,512], index: 0, kind: input, shape index: {}]
  %s1 = inlined_call_operand.vmem [shape: f32[15,6], index: 1, kind: input, shape index: {}]
  %s2 = inlined_call_operand.vmem [shape: f32[2,15,2], index: 2, kind: output, shape index: {}]
  %s3 = sld [smem:[#allocation0]]
  $region45: #{generator_forward.2} parent=0
    _
  %s5 = ssub.s32 1, %s3
  %s6 = scalar_select 0, %s5, %s3
  loop: start=0, step=1, limit=4
  $region2: #{generator_forward.2} parent=0 // loop_pre_header
    _
  $region3: #{generator_forward.2} parent=0 // loop_header
    %s8 = sphi 0, %s12
    %p9 = scmp.ge.s32.totalorder %s8, 4
    %s15 = sphi 0, %s27
    %s16 = sphi 0, %s23
    %s17 = sphi 0, %s15
    %s18 = sphi 0, %s16
    %s19 = sphi 0, %s17
    %s20 = sphi 0, %s18
    %s32 = sphi 0, %s34
    %s35 = sphi 0, %s32
    %s36 = sphi 0, %s35
    %s52 = sphi 0, %s36
    %s56 = sphi 0, %s56
    %s58 = sphi 0, %s56
    %s59 = sphi 0, %s58
    %s73 = sphi 0, %s59
    %s79 = sphi 0, %s81
    %s82 = sphi 0, %s79
    %s83 = sphi 0, %s82
    %s99 = sphi 0, %s83
  $region4: #{generator_forward.2} parent=0 // loop_header_branch
    %11 = sbr.rel (%p9) target = $region8
  $region5: #{generator_forward.2} parent=0 // loop_body
    %s13 = ssub.s32 %s8, 1
    %s14 = ssub.s32 %s8, 2
    %s21 = sadd.s32 1, %s16
    %p22 = scmp.ge.s32.totalorder %s21, 1
    %s23 = scalar_select %p22, 0, %s21
    %s24 = sadd.s32 1, %s15
    %s25 = scalar_select %p22, %s24, %s15
    %p26 = scmp.ge.s32.totalorder %s25, 2
    %s27 = scalar_select %p26, 0, %s25
    %s28 = sadd.s32 %s15, %s16
    %s29 = sadd.s32 %s27, %s23
    %s30 = ssub.s32 %s28, %s29
    %p31 = scmp.eq.s32.totalorder %s30, 0
    %s33 = sadd.s32 %s32, 1
    %s34 = scalar_select %p31, %s32, %s33
    %p37 = pneg %p31
    %p38 = scmp.eq.s32.totalorder %s8, 1
    %p39 = por %p37, %p38
    %p40 = scmp.ne.s32.totalorder %s32, %s35
    %p41 = scmp.eq.s32.totalorder %s8, 0
    %p42 = por %p40, %p41
    %p43 = scmp.ne.s32.totalorder %s32, %s35
    %p44 = scmp.eq.s32.totalorder %s13, 1
    %p45 = por %p43, %p44
    %p46 = scmp.ne.s32.totalorder %s35, %s36
    %p47 = scmp.eq.s32.totalorder %s13, 0
    %p48 = por %p46, %p47
    %p49 = scmp.ne.s32.totalorder %s35, %s36
    %p50 = scmp.eq.s32.totalorder %s14, 1
    %p51 = por %p49, %p50
    %p53 = scmp.ne.s32.totalorder %s36, %s52
    %p54 = scmp.eq.s32.totalorder %s14, 0
    %p55 = por %p53, %p54
    %s57 = sadd.s32 %s56, 1
    %p60 = scmp.eq.s32.totalorder %s8, 1
    %p61 = scmp.ne.s32.totalorder %s56, %s58
    %p62 = scmp.eq.s32.totalorder %s8, 0
    %p63 = por %p61, %p62
    %p64 = scmp.ne.s32.totalorder %s56, %s58
    %p65 = scmp.eq.s32.totalorder %s13, 1
    %p66 = por %p64, %p65
    %p67 = scmp.ne.s32.totalorder %s58, %s59
    %p68 = scmp.eq.s32.totalorder %s13, 0
    %p69 = por %p67, %p68
    %p70 = scmp.ne.s32.totalorder %s58, %s59
    %p71 = scmp.eq.s32.totalorder %s14, 1
    %p72 = por %p70, %p71
    %p74 = scmp.ne.s32.totalorder %s59, %s73
    %p75 = scmp.eq.s32.totalorder %s14, 0
    %p76 = por %p74, %p75
    %s77 = ssub.s32 %s15, %s27
    %p78 = scmp.eq.s32.totalorder %s77, 0
    %s80 = sadd.s32 %s79, 1
    %s81 = scalar_select %p78, %s79, %s80
    %p84 = pneg %p78
    %p85 = scmp.eq.s32.totalorder %s8, 1
    %p86 = por %p84, %p85
    %p87 = scmp.ne.s32.totalorder %s79, %s82
    %p88 = scmp.eq.s32.totalorder %s8, 0
    %p89 = por %p87, %p88
    %p90 = scmp.ne.s32.totalorder %s79, %s82
    %p91 = scmp.eq.s32.totalorder %s13, 1
    %p92 = por %p90, %p91
    %p93 = scmp.ne.s32.totalorder %s82, %s83
    %p94 = scmp.eq.s32.totalorder %s13, 0
    %p95 = por %p93, %p94
    %p96 = scmp.ne.s32.totalorder %s82, %s83
    %p97 = scmp.eq.s32.totalorder %s14, 1
    %p98 = por %p96, %p97
    %p100 = scmp.ne.s32.totalorder %s83, %s99
    %p101 = scmp.eq.s32.totalorder %s14, 0
    %p102 = por %p100, %p101
    %p103 = scmp.le.s32.totalorder 1, %s8
    %p104 = scmp.lt.s32.totalorder %s8, 3
    %p105 = pnand %p103, %p104
    %p106 = pneg %p105
    // Predicated region
    $region9: #{generator_forward.2} parent=5 // pred_check
      _
    $region10: #{generator_forward.2} parent=5 // pred_check_branch
      %108 = sbr.rel (%p105) target = $region12
    $region11: #{generator_forward.2} parent=5 // pred_region
      %s109 = ssub.s32 %s8, 1
      // Predicated region
      $region13: #{generator_forward.2} parent=11 // pred_check
        %p110 = pneg %p69
      $region14: #{generator_forward.2} parent=11 // pred_check_branch
        %112 = sbr.rel (%p110) target = $region16
      $region15: #{generator_forward.2} parent=11 // pred_region
        _
      $region16: #{generator_forward.2} parent=11 // pred_fallthru
        _
    $region12: #{generator_forward.2} parent=5 // pred_fallthru
      _
    %p113 = scmp.lt.s32.totalorder %s8, 2
    // Predicated region
    $region17: #{generator_forward.2} parent=5 // pred_check
      %p114 = pneg %p113
    $region18: #{generator_forward.2} parent=5 // pred_check_branch
      %116 = sbr.rel (%p114) target = $region20
    $region19: #{generator_forward.2} parent=5 // pred_region
      // Predicated region
      $region21: #{generator_forward.2} parent=19 // pred_check
        %p117 = pneg %p42
      $region22: #{generator_forward.2} parent=19 // pred_check_branch
        %119 = sbr.rel (%p117) target = $region24
      $region23: #{generator_forward.2} parent=19 // pred_region
        %s120 = sadd.s32 %s15, %s16
        %s121 = smul.u32 2, %s120
        %p122 = scmp.lt.s32.totalorder %s121, 3
        %s123 = scalar_select %p122, %s121, 3
        %s124 = smul.addr %s123, 8
        %s125 = scalar_lea.vmem %s0, %s124
        %s126 = sadd.s32 %s15, %s16
        %s127 = smul.u32 2, %s126
      $region24: #{generator_forward.2} parent=19 // pred_fallthru
        _
    $region20: #{generator_forward.2} parent=5 // pred_fallthru
      _
    %p128 = scmp.le.s32.totalorder 1, %s8
    %p129 = scmp.lt.s32.totalorder %s8, 3
    %p130 = pnand %p128, %p129
    %p131 = pneg %p130
    // Predicated region
    $region25: #{generator_forward.2} parent=5 // pred_check
      _
    $region26: #{generator_forward.2} parent=5 // pred_check_branch
      %133 = sbr.rel (%p130) target = $region28
    $region27: #{generator_forward.2} parent=5 // pred_region
      %s134 = ssub.s32 %s8, 1
      %s135 = sadd.s32 %s17, %s18
      %s136 = smul.u32 2, %s135
      %p137 = scmp.lt.s32.totalorder %s136, 3
      %s138 = scalar_select %p137, %s136, 3
      %s139 = smul.addr %s138, 8
      %s140 = scalar_lea.vmem %s0, %s139
      %p141 = pneg %p48
      %p142 = pneg %p45
      %p143 = pneg %p69
      %p144 = pneg %p66
      %p145 = pneg %p95
      %p146 = pneg %p92
      %p147 = scmp.lt.s32.totalorder %s17, 1
      %s148 = scalar_select %p147, %s17, 1
      %s149 = smul.addr %s148, 2
      %s150 = smul.addr %s149, 8
      %s151 = scalar_lea.vmem %s2, %s150
      %s152 = sadd.s32 %s17, %s18
      %s153 = smul.u32 2, %s152
      %p154 = scmp.lt.s32.totalorder %s153, 3
      %s155 = scalar_select %p154, %s153, 3
      %s156 = smul.addr %s155, 8
      %s157 = scalar_lea.vmem %s0, %s156
      %s158 = sadd.s32 %s17, %s18
      %s159 = smul.u32 2, %s158
      %p160 = scmp.lt.s32.totalorder %s17, 1
      %s161 = scalar_select %p160, %s17, 1
      %s162 = smul.addr %s161, 2
      %s163 = smul.addr %s162, 8
      %s164 = scalar_lea.vmem %s2, %s163
      %p165 = scmp.eq.s32.totalorder %s18, 0
      // Predicated region
      $region29: #{generator_forward.2} parent=27 // pred_check
        %p166 = pneg %p165
      $region30: #{generator_forward.2} parent=27 // pred_check_branch
        %168 = sbr.rel (%p166) target = $region32
      $region31: #{generator_forward.2} parent=27 // pred_region
        %vm169 = vcmask 15360
        %170 = vst.msk [vmem:[%s164] sm:$0xff] %vm169, 0.0
        %vm171 = vcmask 14336
        %172 = vst.msk [vmem:[%s164 + $0x8] sm:$0x7f] %vm171, 0.0
      $region32: #{generator_forward.2} parent=27 // pred_fallthru
        _
      %v173 = vld [vmem:[%s157] sm:$0x1f]
      %v174 = vld [vmem:[%s157 + $0x8] sm:$0x1f]
      %v175 = vld [vmem:[%s1] sm:$0xff]
      %v176 = vld [vmem:[%s1 + $0x8] sm:$0x7f]
      %178 = vset.pattern.permute.xlu0 5
      %179 = vperm.xlu0 %178, %v175
      %v180 = vpop.permute.xlu0 %179
      %183 = vset.pattern.permute.xlu0 5
      %184 = vperm.xlu0 %183, %v176
      %v185 = vpop.permute.xlu0 %184
      %vm187 = vcmask 39936
      %v188 = vsel %vm187, %v175, 0
      %v190 = vsel %vm187, %v176, 0
      %vm192 = vcmask 1044480
      %v194 = vsel %vm192, %v173, 0
      %v197 = vsel %vm192, %v174, 0
      %199 = vmatprep.subr.mxu0 %v197
      %200 = vmatpush1.msra.mxu0 %v194
      %201 = vmatprep.subr.mxu0 0.0
      %202 = vmatpush1.msra.mxu0 0.0
      %203 = vmatprep.subr.mxu0 0.0
      %204 = vmatpush1.msra.mxu0 0.0
      %205 = vmatprep.subr.mxu0 0.0
      %206 = vmatpush1.msra.mxu0 0.0
      %207 = vmatprep.subr.mxu0 0.0
      %208 = vmatpush1.msra.mxu0 0.0
      %209 = vmatprep.subr.mxu0 0.0
      %210 = vmatpush1.msra.mxu0 0.0
      %211 = vmatprep.subr.mxu0 0.0
      %212 = vmatpush1.msra.mxu0 0.0
      %213 = vmatprep.subr.mxu0 0.0
      %214 = vmatpush1.msra.mxu0 0.0
      %215 = vmatprep.subr.mxu0 0.0
      %216 = vmatpush1.msra.mxu0 0.0
      %217 = vmatprep.subr.mxu0 0.0
      %218 = vmatpush1.msra.mxu0 0.0
      %219 = vmatprep.subr.mxu0 0.0
      %220 = vmatpush1.msra.mxu0 0.0
      %221 = vmatprep.subr.mxu0 0.0
      %222 = vmatpush1.msra.mxu0 0.0
      %223 = vmatprep.subr.mxu0 0.0
      %224 = vmatpush1.msra.mxu0 0.0
      %225 = vmatprep.subr.mxu0 0.0
      %226 = vmatpush1.msra.mxu0 0.0
      %227 = vmatprep.subr.mxu0 0.0
      %228 = vmatpush1.msra.mxu0 0.0
      %229 = vmatprep.subr.mxu0 0.0
      %230 = vmatpush1.msra.mxu0 0.0
      %231 = vmatprep.subr.mxu0 0.0
      %232 = vmatpush1.msra.mxu0 0.0
      %233 = vmatprep.subr.mxu0 0.0
      %234 = vmatpush1.msra.mxu0 0.0
      %235 = vmatprep.subr.mxu0 0.0
      %236 = vmatpush1.msra.mxu0 0.0
      %237 = vmatprep.subr.mxu0 0.0
      %238 = vmatpush1.msra.mxu0 0.0
      %239 = vmatprep.subr.mxu0 0.0
      %240 = vmatpush1.msra.mxu0 0.0
      %241 = vmatprep.subr.mxu0 0.0
      %242 = vmatpush1.msra.mxu0 0.0
      %243 = vmatprep.subr.mxu0 0.0
      %244 = vmatpush1.msra.mxu0 0.0
      %245 = vmatprep.subr.mxu0 0.0
      %246 = vmatpush1.msra.mxu0 0.0
      %247 = vmatprep.subr.mxu0 0.0
      %248 = vmatpush1.msra.mxu0 0.0
      %249 = vmatprep.subr.mxu0 0.0
      %250 = vmatpush1.msra.mxu0 0.0
      %251 = vmatprep.subr.mxu0 0.0
      %252 = vmatpush1.msra.mxu0 0.0
      %253 = vmatprep.subr.mxu0 0.0
      %254 = vmatpush1.msra.mxu0 0.0
      %255 = vmatprep.subr.mxu0 0.0
      %256 = vmatpush1.msra.mxu0 0.0
      %257 = vmatprep.subr.mxu0 0.0
      %258 = vmatpush1.msra.mxu0 0.0
      %259 = vmatprep.subr.mxu0 0.0
      %260 = vmatpush1.msra.mxu0 0.0
      %261 = vmatprep.subr.mxu0 0.0
      %262 = vmatpush1.msra.mxu0 0.0
      %263 = vmatprep.mubr.f32.mxu0 0.0
      %264 = vmatmul.mubr.f32.gmra.mrb[0].mxu0 %v188
      %v265 = vpop.f32.mrb[0].mxu0
      %v266 = vadd.f32 %v180, %v265
      %v267 = vpop.f32.mrb[0].mxu0
      %v268 = vadd.f32 %v180, %v267
      %269 = vmatprep.mubr.f32.mxu0 0.0
      %270 = vmatmul.mubr.f32.gmra.mrb[0].mxu0 %v190
      %v271 = vpop.f32.mrb[0].mxu0
      %v272 = vadd.f32 %v185, %v271
      %v273 = vpop.f32.mrb[0].mxu0
      %v274 = vadd.f32 %v185, %v273
      %275 = vdwg.mxu0
      %v276 = vmul.f32 %v266, 0.2
      %v277 = vmul.f32 %v268, 0.2
      %v278 = vmul.f32 %v272, 0.2
      %v279 = vmul.f32 %v274, 0.2
      %v280 = vmax.f32 %v266, %v276
      %v281 = vmax.f32 %v268, %v277
      %v282 = vmax.f32 %v272, %v278
      %v283 = vmax.f32 %v274, %v279
      %v284 = vld [vmem:[%s164] sm:$0xff]
      %v285 = vld [vmem:[%s164 + $0x8] sm:$0x7f]
      %v286 = vadd.f32 %v280, %v281
      %287 = vadd.xlane.f32.xlu0 %v286
      %v288 = vpop.xlane.xlu0 %287
      %vm289 = vcmask 1046528
      %v290 = vsel %vm289, %v282, 0.0
      %v291 = vsel %vm289, %v283, 0.0
      %v292 = vadd.f32 %v290, %v291
      %293 = vadd.xlane.f32.xlu0 %v292
      %v294 = vpop.xlane.xlu0 %293
      %v295 = vadd.f32 %v284, %v288
      %v296 = vadd.f32 %v285, %v294
      %vm297 = vcmask 7168
      %298 = vst.msk [vmem:[%s164] sm:$0xff] %vm297, %v295
      %vm299 = vcmask 6144
      %300 = vst.msk [vmem:[%s164 + $0x8] sm:$0x7f] %vm299, %v296
      %v301 = vld [vmem:[%s164] sm:$0xff]
      %v302 = vld [vmem:[%s164 + $0x8] sm:$0x7f]
      %v303 = vmul.f32 %v280, %v280
      %v304 = vmul.f32 %v281, %v281
      %v305 = vmul.f32 %v282, %v282
      %v306 = vmul.f32 %v283, %v283
      %v307 = vadd.f32 %v303, %v304
      %308 = vadd.xlane.f32.xlu0 %v307
      %v309 = vpop.xlane.xlu0 %308
      %v310 = vsel %vm289, %v305, 0.0
      %v311 = vsel %vm289, %v306, 0.0
      %v312 = vadd.f32 %v310, %v311
      %313 = vadd.xlane.f32.xlu0 %v312
      %v314 = vpop.xlane.xlu0 %313
      %v315 = vadd.f32 %v301, %v309
      %v316 = vadd.f32 %v302, %v314
      %vm317 = vcmask 15368
      %318 = vst.msk [vmem:[%s164] sm:$0xff] %vm317, %v315
      %vm319 = vcmask 14344
      %320 = vst.msk [vmem:[%s164 + $0x8] sm:$0x7f] %vm319, %v316
      %p321 = scmp.lt.s32.totalorder %s17, 1
      %s322 = scalar_select %p321, %s17, 1
      %s323 = smul.addr %s322, 2
      %s324 = smul.addr %s323, 8
      %s325 = scalar_lea.vmem %s2, %s324
      // Predicated region
      $region33: #{generator_forward.2} parent=27 // pred_check
        %p326 = pneg %p92
      $region34: #{generator_forward.2} parent=27 // pred_check_branch
        %328 = sbr.rel (%p326) target = $region36
      $region35: #{generator_forward.2} parent=27 // pred_region
        _
      $region36: #{generator_forward.2} parent=27 // pred_fallthru
        _
    $region28: #{generator_forward.2} parent=5 // pred_fallthru
      _
    %p329 = scmp.le.s32.totalorder 2, %s8
    // Predicated region
    $region37: #{generator_forward.2} parent=5 // pred_check
      %p330 = pneg %p329
    $region38: #{generator_forward.2} parent=5 // pred_check_branch
      %332 = sbr.rel (%p330) target = $region40
    $region39: #{generator_forward.2} parent=5 // pred_region
      %s333 = ssub.s32 %s8, 2
      // Predicated region
      $region41: #{generator_forward.2} parent=39 // pred_check
        %p334 = pneg %p98
      $region42: #{generator_forward.2} parent=39 // pred_check_branch
        %336 = sbr.rel (%p334) target = $region44
      $region43: #{generator_forward.2} parent=39 // pred_region
        %p337 = scmp.lt.s32.totalorder %s19, 1
        %s338 = scalar_select %p337, %s19, 1
        %s339 = smul.addr %s338, 2
        %s340 = smul.addr %s339, 8
        %s341 = scalar_lea.vmem %s2, %s340
      $region44: #{generator_forward.2} parent=39 // pred_fallthru
        _
    $region40: #{generator_forward.2} parent=5 // pred_fallthru
      _
  $region6: #{generator_forward.2} parent=0 // loop_footer
    %s12 = sadd.s32 1, %s8
  $region7: #{generator_forward.2} parent=0 // loop_footer_branch
    %7 = sbr.rel target = $region3
  $region8: #{generator_forward.2} parent=0 // loop_exit
    _

</llo_original>
